<compile_context>
chip_gen: v6e
topology: v6e:2x2x1
jax: 0.10.0
libtpu: 0.0.40
codegen_flags: <defaults>
</compile_context>

<pallas_src>
import jax
import jax.numpy as jnp
from jax.experimental import pallas as pl
from jax.experimental.pallas import tpu as pltpu

EPSILON = 1.0  # matches `epsilon = 1` in the PyTorch file


def _adj_kernel(emb_ref, adj_ref):
    """adj = softmax(E @ E.T - 10*I), computed once."""
    n = adj_ref.shape[0]
    e = emb_ref[...].astype(jnp.float32)
    logits = jnp.dot(e, e.T, preferred_element_type=jnp.float32)
    row = jax.lax.broadcasted_iota(jnp.int32, (n, n), 0)
    col = jax.lax.broadcasted_iota(jnp.int32, (n, n), 1)
    logits = logits - 10.0 * (row == col).astype(jnp.float32)
    logits = logits - jnp.max(logits, axis=-1, keepdims=True)
    p = jnp.exp(logits)
    adj_ref[...] = p / jnp.sum(p, axis=-1, keepdims=True)


def _norm_kernel(adj_ref, x_ref, out_ref, mean_ref, std_ref):
    """One column chunk of the lane-dense (N, M) layout.

      mean = adj @ x          ex2 = adj @ (x*x)       (fused: one matmul)
      var  = ex2 - mean^2 + 1e-5
      out  = (x - mean) * rsqrt(var + EPSILON)
      std  = sqrt(var)
    """
    adj = adj_ref[...]                               # (N, N) f32
    x = x_ref[...].astype(jnp.float32)               # (N, Mc)
    mc = x.shape[-1]

    # Fused matmul: same LHS, doubled RHS free dimension -> one MXU issue.
    # NOTE: operands kept f32 for bit-faithful correctness vs. the reference;
    # bf16 operands (v6e/v7x MXU) would be a further ~2x matmul-throughput win.
    rhs = jnp.concatenate([x, x * x], axis=-1)       # (N, 2*Mc)
    res = jnp.dot(adj, rhs, preferred_element_type=jnp.float32)
    mean = res[:, :mc]
    ex2 = res[:, mc:]

    var = ex2 - mean * mean + 1e-5
    inv = jax.lax.rsqrt(var + EPSILON)               # EUP, frees the VALU slot
    out_ref[...] = ((x - mean) * inv).astype(out_ref.dtype)
    mean_ref[...] = mean.astype(mean_ref.dtype)
    std_ref[...] = jnp.sqrt(var).astype(std_ref.dtype)


def _pick_col_tile(n, m):
    """Lane-dense column tile: multiple of 128, sized for comfortable VMEM."""
    if m < 128 or m % 128 != 0:
        return m                                     # full extent is always legal
    budget_words = (2 << 20) // 4                    # ~2 MiB per f32 tile
    cols = (budget_words // max(n, 1)) // 128 * 128
    cols = max(128, min(cols, 2048))
    return min(cols, m)


@jax.jit
def ada_spatial_norm(x, node_embedding):
    """x: (B, C, N, T); node_embedding: (N, D). Returns (out, mean, std)."""
    b, c, n, t = x.shape
    nn_, d = node_embedding.shape
    assert nn_ == n
    m = b * c * t

    # One-shot adjacency kernel (whole arrays resident in VMEM).
    adj = pl.pallas_call(
        _adj_kernel,
        out_shape=jax.ShapeDtypeStruct((n, n), jnp.float32),
    )(node_embedding.astype(jnp.float32))

    # Layout glue: nodes on sublanes, flattened (B, C, T) on lanes.
    x_nm = jnp.transpose(x, (2, 0, 1, 3)).reshape(n, m)

    col_tile = _pick_col_tile(n, m)
    grid = (pl.cdiv(m, col_tile),)

    # VMEM budget: adj (2 bufs) + input tile (2 bufs) + 3 output tiles (2 bufs
    # each) + in-kernel temporaries (concat rhs + matmul result), 1.5x headroom.
    vmem_bytes = 4 * (2 * n * n + 12 * n * col_tile)
    vmem_bytes = int(min(max(int(vmem_bytes * 1.5), 16 << 20), 48 << 20))

    out_nm, mean_nm, std_nm = pl.pallas_call(
        _norm_kernel,
        out_shape=(
            jax.ShapeDtypeStruct((n, m), x.dtype),
            jax.ShapeDtypeStruct((n, m), x.dtype),
            jax.ShapeDtypeStruct((n, m), x.dtype),
        ),
        grid_spec=pltpu.PrefetchScalarGridSpec(
            num_scalar_prefetch=0,
            grid=grid,
            in_specs=[
                pl.BlockSpec((n, n), lambda j: (0, 0)),          # adj (constant)
                pl.BlockSpec((n, col_tile), lambda j: (0, j)),   # x column chunk
            ],
            out_specs=[
                pl.BlockSpec((n, col_tile), lambda j: (0, j)),
                pl.BlockSpec((n, col_tile), lambda j: (0, j)),
                pl.BlockSpec((n, col_tile), lambda j: (0, j)),
            ],
        ),
        compiler_params=pltpu.CompilerParams(
            dimension_semantics=("parallel",),   # adj precomputed -> no carry
            vmem_limit_bytes=vmem_bytes,
        ),
    )(adj, x_nm)

    def back(y):  # (N, B*C*T) -> (B, C, N, T)
        return jnp.transpose(y.reshape(n, b, c, t), (1, 2, 0, 3))

    return back(out_nm), back(mean_nm), back(std_nm)


def _reference(x, emb):
    b, c, n, t = x.shape
    adj = emb @ emb.T - 10.0 * jnp.eye(n, dtype=x.dtype)
    adj = jax.nn.softmax(adj, axis=-1)
    x_f = jnp.transpose(x, (0, 3, 2, 1)).reshape(b * t, n, c)
    mean_f = jnp.einsum("ij,bjc->bic", adj, x_f)
    var_f = jnp.einsum("ij,bjc->bic", adj, x_f ** 2) - mean_f ** 2 + 1e-5
    back = lambda y: jnp.transpose(y.reshape(b, t, n, c), (0, 3, 2, 1))
    mean, var = back(mean_f), back(var_f)
    out = (x - mean) / jnp.sqrt(var + EPSILON)
    return out, mean, jnp.sqrt(var)


if __name__ == "__main__":
    key = jax.random.PRNGKey(0)
    k1, k2 = jax.random.split(key)
    b, c, n, t, d = 2, 4, 16, 8, 32
    x = jax.random.normal(k1, (b, c, n, t), dtype=jnp.float32)
    # deterministic synthetic parameter (module initializes zeros; use small
    # random values so the softmax adjacency is non-trivial)
    node_embedding = 0.1 * jax.random.normal(k2, (n, d), dtype=jnp.float32)

    out, mean, std = ada_spatial_norm(x, node_embedding)
    jax.block_until_ready((out, mean, std))

    ref_out, ref_mean, ref_std = _reference(x, node_embedding)
    assert jnp.allclose(out, ref_out, atol=1e-4, rtol=1e-4)
    assert jnp.allclose(mean, ref_mean, atol=1e-4, rtol=1e-4)
    assert jnp.allclose(std, ref_std, atol=1e-4, rtol=1e-4)

    print("KERNEL_OK")
</pallas_src>

<mosaic_0001>
module attributes {stable_mosaic.version = 11 : i64} {
  func.func @_norm_kernel(%arg0: i32, %arg1: memref<16x16xf32, #tpu.memory_space<vmem>>, %arg2: memref<16x64xf32, #tpu.memory_space<vmem>>, %arg3: memref<16x64xf32, #tpu.memory_space<vmem>>, %arg4: memref<16x64xf32, #tpu.memory_space<vmem>>, %arg5: memref<16x64xf32, #tpu.memory_space<vmem>>) attributes {dimension_semantics = [#tpu.dimension_semantics<parallel>], iteration_bounds = array<i64: 1>, scalar_prefetch = 0 : i64, scratch_operands = 0 : i64, tpu.core_type = #tpu.core_type<tc>, window_params = [{pipeline_mode = #tpu.pipeline_mode<synchronous>, transform_indices = @transform_0, window_bounds = array<i64: 16, 16>}, {transform_indices = @transform_1, window_bounds = array<i64: 16, 64>}, {transform_indices = @transform_2, window_bounds = array<i64: 16, 64>}, {transform_indices = @transform_3, window_bounds = array<i64: 16, 64>}, {transform_indices = @transform_4, window_bounds = array<i64: 16, 64>}]} {
    %c0 = arith.constant 0 : index
    %c0_0 = arith.constant 0 : index
    %0 = vector.load %arg1[%c0, %c0_0] : memref<16x16xf32, #tpu.memory_space<vmem>>, vector<16x16xf32>
    %c0_1 = arith.constant 0 : index
    %c0_2 = arith.constant 0 : index
    %1 = vector.load %arg2[%c0_1, %c0_2] : memref<16x64xf32, #tpu.memory_space<vmem>>, vector<16x64xf32>
    %2 = arith.mulf %1, %1 : vector<16x64xf32>
    %3 = tpu.concatenate %1, %2 in 1 : vector<16x64xf32>, vector<16x64xf32> -> vector<16x128xf32>
    %cst = arith.constant dense<0.000000e+00> : vector<16x128xf32>
    %4 = tpu.matmul %0, %3, %cst {dimension_numbers = #tpu.dot_dimension_numbers<[1], [0], [0], [1], [0, 0, 1, 1], [], []>} : vector<16x16xf32>, vector<16x128xf32>, vector<16x128xf32> -> vector<16x128xf32>
    %5 = vector.extract_strided_slice %4 {offsets = [0, 0], sizes = [16, 64], strides = [1, 1]} : vector<16x128xf32> to vector<16x64xf32>
    %6 = vector.extract_strided_slice %4 {offsets = [0, 64], sizes = [16, 64], strides = [1, 1]} : vector<16x128xf32> to vector<16x64xf32>
    %7 = arith.mulf %5, %5 : vector<16x64xf32>
    %8 = arith.subf %6, %7 : vector<16x64xf32>
    %cst_3 = arith.constant 9.99999974E-6 : f32
    %9 = vector.broadcast %cst_3 : f32 to vector<16x64xf32>
    %10 = arith.addf %8, %9 : vector<16x64xf32>
    %cst_4 = arith.constant 1.000000e+00 : f32
    %11 = vector.broadcast %cst_4 : f32 to vector<16x64xf32>
    %12 = arith.addf %10, %11 : vector<16x64xf32>
    %13 = math.rsqrt %12 : vector<16x64xf32>
    %14 = arith.subf %1, %5 : vector<16x64xf32>
    %15 = arith.mulf %14, %13 : vector<16x64xf32>
    %c0_5 = arith.constant 0 : index
    %c0_6 = arith.constant 0 : index
    %16 = vector.load %arg3[%c0_5, %c0_6] : memref<16x64xf32, #tpu.memory_space<vmem>>, vector<16x64xf32>
    tpu.vector_store %arg3[%c0_5, %c0_6], %15 {strides = array<i32>} : memref<16x64xf32, #tpu.memory_space<vmem>>, vector<16x64xf32>,
    %c0_7 = arith.constant 0 : index
    %c0_8 = arith.constant 0 : index
    %17 = vector.load %arg4[%c0_7, %c0_8] : memref<16x64xf32, #tpu.memory_space<vmem>>, vector<16x64xf32>
    tpu.vector_store %arg4[%c0_7, %c0_8], %5 {strides = array<i32>} : memref<16x64xf32, #tpu.memory_space<vmem>>, vector<16x64xf32>,
    %18 = math.sqrt %10 : vector<16x64xf32>
    %c0_9 = arith.constant 0 : index
    %c0_10 = arith.constant 0 : index
    %19 = vector.load %arg5[%c0_9, %c0_10] : memref<16x64xf32, #tpu.memory_space<vmem>>, vector<16x64xf32>
    tpu.vector_store %arg5[%c0_9, %c0_10], %18 {strides = array<i32>} : memref<16x64xf32, #tpu.memory_space<vmem>>, vector<16x64xf32>,
    return
  }
  func.func @transform_0(%arg0: i32) -> (i32, i32) {
    %c0_i32 = arith.constant 0 : i32
    %c0_i32_0 = arith.constant 0 : i32
    %c0_i32_1 = arith.constant 0 : i32
    return %c0_i32, %c0_i32_0 : i32, i32
  }
  func.func @transform_1(%arg0: i32) -> (i32, i32) {
    %c0_i32 = arith.constant 0 : i32
    %c0_i32_0 = arith.constant 0 : i32
    return %c0_i32, %arg0 : i32, i32
  }
  func.func @transform_2(%arg0: i32) -> (i32, i32) {
    %c0_i32 = arith.constant 0 : i32
    %c0_i32_0 = arith.constant 0 : i32
    return %c0_i32, %arg0 : i32, i32
  }
  func.func @transform_3(%arg0: i32) -> (i32, i32) {
    %c0_i32 = arith.constant 0 : i32
    %c0_i32_0 = arith.constant 0 : i32
    return %c0_i32, %arg0 : i32, i32
  }
  func.func @transform_4(%arg0: i32) -> (i32, i32) {
    %c0_i32 = arith.constant 0 : i32
    %c0_i32_0 = arith.constant 0 : i32
    return %c0_i32, %arg0 : i32, i32
  }
}

module attributes {stable_mosaic.version = 11 : i64} {
  func.func @_adj_kernel(%arg0: memref<16x32xf32, #tpu.memory_space<vmem>>, %arg1: memref<16x16xf32, #tpu.memory_space<vmem>>) attributes {dimension_semantics = [], scalar_prefetch = 0 : i64, scratch_operands = 0 : i64, tpu.core_type = #tpu.core_type<tc>} {
    %c0 = arith.constant 0 : index
    %c0_0 = arith.constant 0 : index
    %0 = vector.load %arg0[%c0, %c0_0] : memref<16x32xf32, #tpu.memory_space<vmem>>, vector<16x32xf32>
    %1 = tpu.transpose %0, [1, 0] : vector<16x32xf32> -> vector<32x16xf32>
    %cst = arith.constant dense<0.000000e+00> : vector<16x16xf32>
    %2 = tpu.matmul %0, %1, %cst {dimension_numbers = #tpu.dot_dimension_numbers<[1], [0], [0], [1], [0, 0, 1, 1], [], []>} : vector<16x32xf32>, vector<32x16xf32>, vector<16x16xf32> -> vector<16x16xf32>
    %3 = tpu.iota {dimensions = array<i32: 0>} : vector<16x16xi32>
    %4 = tpu.iota {dimensions = array<i32: 1>} : vector<16x16xi32>
    %5 = arith.cmpi eq, %3, %4 : vector<16x16xi32>
    %6 = arith.extui %5 : vector<16x16xi1> to vector<16x16xi32>
    %7 = arith.sitofp %6 : vector<16x16xi32> to vector<16x16xf32>
    %cst_1 = arith.constant 1.000000e+01 : f32
    %8 = vector.broadcast %cst_1 : f32 to vector<16x16xf32>
    %9 = arith.mulf %8, %7 : vector<16x16xf32>
    %10 = arith.subf %2, %9 : vector<16x16xf32>
    %cst_2 = arith.constant dense<0xFF800000> : vector<16xf32>
    %11 = vector.multi_reduction <maximumf>, %10, %cst_2 [1] : vector<16x16xf32> to vector<16xf32>
    %12 = vector.shape_cast %11 : vector<16xf32> to vector<16x1xf32>
    %13 = vector.broadcast %12 : vector<16x1xf32> to vector<16x16xf32>
    %14 = arith.subf %10, %13 : vector<16x16xf32>
    %15 = math.exp %14 : vector<16x16xf32>
    %cst_3 = arith.constant dense<0.000000e+00> : vector<16xf32>
    %16 = vector.multi_reduction <add>, %15, %cst_3 [1] : vector<16x16xf32> to vector<16xf32>
    %17 = vector.shape_cast %16 : vector<16xf32> to vector<16x1xf32>
    %18 = vector.broadcast %17 : vector<16x1xf32> to vector<16x16xf32>
    %19 = arith.divf %15, %18 : vector<16x16xf32>
    %c0_4 = arith.constant 0 : index
    %c0_5 = arith.constant 0 : index
    %20 = vector.load %arg1[%c0_4, %c0_5] : memref<16x16xf32, #tpu.memory_space<vmem>>, vector<16x16xf32>
    tpu.vector_store %arg1[%c0_4, %c0_5], %19 {strides = array<i32>} : memref<16x16xf32, #tpu.memory_space<vmem>>, vector<16x16xf32>,
    return
  }
}

</mosaic_0001>

<llo_original>
// kernel: ada_spatial_norm.2
$region0: #{ada_spatial_norm.2}
  #allocation0 [shape = 'u32[]', space=smem, size = 0x4, offset = 0x4, fixed_abs, tag = 'smem constant byte address 0x4 - core index']
  #allocation1 [shape = 'u32[144,128]{1,0:T(1,128)}', space=vmem, size = 0x12000, scoped, tag = 'internal scratch']
  %s0 = inlined_call_operand.vmem [shape: f32[16,32], index: 0, kind: input, shape index: {}]
  %s1 = inlined_call_operand.vmem [shape: f32[16,16], index: 1, kind: output, shape index: {}]
  %s2 = sld [smem:[#allocation0]]
  $region14: #{ada_spatial_norm.2} parent=0
    _
  %s4 = ssub.s32 1, %s2
  %s5 = scalar_select 0, %s4, %s2
  // Predicated region
  $region2: #{ada_spatial_norm.2} parent=0 // pred_check
    _
  $region3: #{ada_spatial_norm.2} parent=0 // pred_check_branch
    %7 = sbr.rel (0) target = $region5
  $region4: #{ada_spatial_norm.2} parent=0 // pred_region
    _
  $region5: #{ada_spatial_norm.2} parent=0 // pred_fallthru
    _
  %v8 = vld [vmem:[%s0] sm:$0xff]
  %v9 = vld [vmem:[%s0 + $0x8] sm:$0xff]
  %vm10 = vcmask 261120
  %v12 = vsel %vm10, %v8, 0
  %v15 = vsel %vm10, %v9, 0
  %17 = vmatprep.subr.mxu0 0.0
  %18 = vmatpush1.xpose.msra.mxu0 0.0
  %19 = vmatprep.subr.mxu0 0.0
  %20 = vmatpush1.xpose.msra.mxu0 0.0
  %21 = vmatprep.subr.mxu0 0.0
  %22 = vmatpush1.xpose.msra.mxu0 0.0
  %23 = vmatprep.subr.mxu0 0.0
  %24 = vmatpush1.xpose.msra.mxu0 0.0
  %25 = vmatprep.subr.mxu0 0.0
  %26 = vmatpush1.xpose.msra.mxu0 0.0
  %27 = vmatprep.subr.mxu0 0.0
  %28 = vmatpush1.xpose.msra.mxu0 0.0
  %29 = vmatprep.subr.mxu0 0.0
  %30 = vmatpush1.xpose.msra.mxu0 0.0
  %31 = vmatprep.subr.mxu0 0.0
  %32 = vmatpush1.xpose.msra.mxu0 0.0
  %33 = vmatprep.subr.mxu0 0.0
  %34 = vmatpush1.xpose.msra.mxu0 0.0
  %35 = vmatprep.subr.mxu0 0.0
  %36 = vmatpush1.xpose.msra.mxu0 0.0
  %37 = vmatprep.subr.mxu0 0.0
  %38 = vmatpush1.xpose.msra.mxu0 0.0
  %39 = vmatprep.subr.mxu0 0.0
  %40 = vmatpush1.xpose.msra.mxu0 0.0
  %41 = vmatprep.subr.mxu0 0.0
  %42 = vmatpush1.xpose.msra.mxu0 0.0
  %43 = vmatprep.subr.mxu0 0.0
  %44 = vmatpush1.xpose.msra.mxu0 0.0
  %45 = vmatprep.subr.mxu0 0.0
  %46 = vmatpush1.xpose.msra.mxu0 %v15
  %47 = vmatprep.subr.mxu0 0.0
  %48 = vmatpush1.xpose.msra.mxu0 %v12
  %49 = vmatprep.subr.mxu0 0.0
  %50 = vmatpush2.xpose.msra.mxu0 0.0
  %51 = vmatprep.subr.mxu0 0.0
  %52 = vmatpush2.xpose.msra.mxu0 0.0
  %53 = vmatprep.subr.mxu0 0.0
  %54 = vmatpush2.xpose.msra.mxu0 0.0
  %55 = vmatprep.subr.mxu0 0.0
  %56 = vmatpush2.xpose.msra.mxu0 0.0
  %57 = vmatprep.subr.mxu0 0.0
  %58 = vmatpush2.xpose.msra.mxu0 0.0
  %59 = vmatprep.subr.mxu0 0.0
  %60 = vmatpush2.xpose.msra.mxu0 0.0
  %61 = vmatprep.subr.mxu0 0.0
  %62 = vmatpush2.xpose.msra.mxu0 0.0
  %63 = vmatprep.subr.mxu0 0.0
  %64 = vmatpush2.xpose.msra.mxu0 0.0
  %65 = vmatprep.subr.mxu0 0.0
  %66 = vmatpush2.xpose.msra.mxu0 0.0
  %67 = vmatprep.subr.mxu0 0.0
  %68 = vmatpush2.xpose.msra.mxu0 0.0
  %69 = vmatprep.subr.mxu0 0.0
  %70 = vmatpush2.xpose.msra.mxu0 0.0
  %71 = vmatprep.subr.mxu0 0.0
  %72 = vmatpush2.xpose.msra.mxu0 0.0
  %73 = vmatprep.subr.mxu0 0.0
  %74 = vmatpush2.xpose.msra.mxu0 0.0
  %75 = vmatprep.subr.mxu0 0.0
  %76 = vmatpush2.xpose.msra.mxu0 0.0
  %77 = vmatprep.subr.mxu0 0.0
  %78 = vmatpush2.xpose.msra.mxu0 0.0
  %79 = vmatprep.subr.mxu0 0.0
  %80 = vmatpush2.xpose.msra.mxu0 0.0
  %81 = vmatprep.mubr.f32.mxu0 0.0
  %82 = vmatmul.mubr.f32.gmra.mxu0 %v12
  %v83 = vpop.f32.mrf.mxu0
  %v84 = vadd.f32 0.0, %v83
  %v85 = vpop.f32.mrf.mxu0
  %86 = vmatprep.mubr.f32.mxu0 0.0
  %87 = vmatmul.mubr.f32.gmra.mxu0 %v15
  %v88 = vpop.f32.mrf.mxu0
  %v89 = vadd.f32 0.0, %v88
  %v90 = vpop.f32.mrf.mxu0
  %91 = vdwg.mxu0
  %v92 = vlaneseq
  %v93 = vshrl.u32 %v92, 7
  %v94 = vadd.s32 %v93, 8
  %v95 = vlaneseq
  %v96 = vand.u32 %v95, 127
  %vm97 = vcmp.eq.s32.totalorder %v93, %v96
  %vm98 = vcmp.eq.s32.totalorder %v94, %v96
  %v99 = vsel %vm97, 1, 0
  %v100 = vsel %vm98, 1, 0
  %v101 = vcvt.s32.f32 %v99
  %v102 = vcvt.s32.f32 %v100
  %v103 = vmul.f32 %v101, 10.0
  %v104 = vmul.f32 %v102, 10.0
  %v105 = vsub.f32 %v84, %v103
  %v106 = vsub.f32 %v89, %v104
  %vm107 = vcmask 130048
  %v108 = vsel %vm107, %v105, -inf
  %109 = vmax.xlane.f32.xlu0 %v108
  %v110 = vpop.xlane.xlu0 %109
  %v111 = vsel %vm107, %v106, -inf
  %112 = vmax.xlane.f32.xlu0 %v111
  %v113 = vpop.xlane.xlu0 %112
  %v114 = vsub.f32 %v105, %v110
  %v115 = vsub.f32 %v106, %v113
  %v116 = vmul.f32 %v114, 1.442695
  %v117 = vpow.pop %v116
  %v118 = vmul.f32 %v115, 1.442695
  %v119 = vpow.pop %v118
  %v120 = vsel %vm107, %v117, 0.0
  %121 = vadd.xlane.f32.xlu0 %v120
  %v122 = vpop.xlane.xlu0 %121
  %v123 = vsel %vm107, %v119, 0.0
  %124 = vadd.xlane.f32.xlu0 %v123
  %v125 = vpop.xlane.xlu0 %124
  %v126 = vrcp.pop %v122
  %v127 = vmul.f32 %v117, %v126
  %v128 = vrcp.pop %v125
  %v129 = vmul.f32 %v119, %v128
  %130 = vst.msk [vmem:[%s1] sm:$0xff] %vm107, %v127
  %131 = vst.msk [vmem:[%s1 + $0x8] sm:$0xff] %vm107, %v129
  // Predicated region
  $region6: #{ada_spatial_norm.2} parent=0 // pred_check
    _
  $region7: #{ada_spatial_norm.2} parent=0 // pred_check_branch
    %133 = sbr.rel (0) target = $region9
  $region8: #{ada_spatial_norm.2} parent=0 // pred_region
    _
  $region9: #{ada_spatial_norm.2} parent=0 // pred_fallthru
    _
  // Predicated region
  $region10: #{ada_spatial_norm.2} parent=0 // pred_check
    _
  $region11: #{ada_spatial_norm.2} parent=0 // pred_check_branch
    %135 = sbr.rel (0) target = $region13
  $region12: #{ada_spatial_norm.2} parent=0 // pred_region
    _
  $region13: #{ada_spatial_norm.2} parent=0 // pred_fallthru
    _

// kernel: ada_spatial_norm.3
$region0: #{ada_spatial_norm.3}
  #allocation0 [shape = 'u32[]', space=smem, size = 0x4, offset = 0x4, fixed_abs, tag = 'smem constant byte address 0x4 - core index']
  #allocation1 [shape = 'u32[144,128]{1,0:T(1,128)}', space=vmem, size = 0x12000, scoped, tag = 'internal scratch']
  %s0 = inlined_call_operand.vmem [shape: f32[16,16], index: 0, kind: input, shape index: {}]
  %s1 = inlined_call_operand.vmem [shape: f32[16,64], index: 1, kind: input, shape index: {}]
  %s2 = inlined_call_operand.vmem [shape: f32[16,64], index: 2, kind: output, shape index: {0}]
  %s3 = inlined_call_operand.vmem [shape: f32[16,64], index: 3, kind: output, shape index: {1}]
  %s4 = inlined_call_operand.vmem [shape: f32[16,64], index: 4, kind: output, shape index: {2}]
  %5 = xla_tuple %s2, %s3, %s4
  %s6 = sld [smem:[#allocation0]]
  $region34: #{ada_spatial_norm.3} parent=0
    _
  %s8 = ssub.s32 1, %s6
  %s9 = scalar_select 0, %s8, %s6
  // Predicated region
  $region2: #{ada_spatial_norm.3} parent=0 // pred_check
    _
  $region3: #{ada_spatial_norm.3} parent=0 // pred_check_branch
    %11 = sbr.rel (0) target = $region5
  $region4: #{ada_spatial_norm.3} parent=0 // pred_region
    _
  $region5: #{ada_spatial_norm.3} parent=0 // pred_fallthru
    _
  // Predicated region
  $region6: #{ada_spatial_norm.3} parent=0 // pred_check
    _
  $region7: #{ada_spatial_norm.3} parent=0 // pred_check_branch
    %13 = sbr.rel (0) target = $region9
  $region8: #{ada_spatial_norm.3} parent=0 // pred_region
    _
  $region9: #{ada_spatial_norm.3} parent=0 // pred_fallthru
    _
  %v14 = vld [vmem:[%s0] sm:$0xff]
  %v15 = vld [vmem:[%s0 + $0x8] sm:$0xff]
  %v16 = vld [vmem:[%s1] sm:$0xff]
  %v17 = vld [vmem:[%s1 + $0x8] sm:$0xff]
  %v18 = vmul.f32 %v16, %v16
  %v19 = vmul.f32 %v17, %v17
  %22 = vrot.lane.b32.xlu0 %v18, 64
  %v23 = vpop.permute.xlu0 %22
  %24 = vrot.lane.b32.xlu0 %v19, 64
  %v25 = vpop.permute.xlu0 %24
  %vm28 = vcmask 523264
  %v29 = vsel %vm28, %v16, %v23
  %v30 = vsel %vm28, %v17, %v25
  %vm31 = vcmask 130048
  %v33 = vsel %vm31, %v14, 0
  %v36 = vsel %vm31, %v15, 0
  %38 = vmatprep.subr.mxu0 0.0
  %39 = vmatpush1.msra.mxu0 0.0
  %40 = vmatprep.subr.mxu0 0.0
  %41 = vmatpush1.msra.mxu0 0.0
  %42 = vmatprep.subr.mxu0 0.0
  %43 = vmatpush1.msra.mxu0 0.0
  %44 = vmatprep.subr.mxu0 0.0
  %45 = vmatpush1.msra.mxu0 0.0
  %46 = vmatprep.subr.mxu0 0.0
  %47 = vmatpush1.msra.mxu0 0.0
  %48 = vmatprep.subr.mxu0 0.0
  %49 = vmatpush1.msra.mxu0 0.0
  %50 = vmatprep.subr.mxu0 0.0
  %51 = vmatpush1.msra.mxu0 0.0
  %52 = vmatprep.subr.mxu0 0.0
  %53 = vmatpush1.msra.mxu0 0.0
  %54 = vmatprep.subr.mxu0 0.0
  %55 = vmatpush1.msra.mxu0 0.0
  %56 = vmatprep.subr.mxu0 0.0
  %57 = vmatpush1.msra.mxu0 0.0
  %58 = vmatprep.subr.mxu0 0.0
  %59 = vmatpush1.msra.mxu0 0.0
  %60 = vmatprep.subr.mxu0 0.0
  %61 = vmatpush1.msra.mxu0 0.0
  %62 = vmatprep.subr.mxu0 0.0
  %63 = vmatpush1.msra.mxu0 0.0
  %64 = vmatprep.subr.mxu0 0.0
  %65 = vmatpush1.msra.mxu0 0.0
  %66 = vmatprep.subr.mxu0 0.0
  %67 = vmatpush1.msra.mxu0 %v30
  %68 = vmatprep.subr.mxu0 0.0
  %69 = vmatpush1.msra.mxu0 %v29
  %70 = vmatprep.subr.mxu0 0.0
  %71 = vmatpush2.msra.mxu0 0.0
  %72 = vmatprep.subr.mxu0 0.0
  %73 = vmatpush2.msra.mxu0 0.0
  %74 = vmatprep.subr.mxu0 0.0
  %75 = vmatpush2.msra.mxu0 0.0
  %76 = vmatprep.subr.mxu0 0.0
  %77 = vmatpush2.msra.mxu0 0.0
  %78 = vmatprep.subr.mxu0 0.0
  %79 = vmatpush2.msra.mxu0 0.0
  %80 = vmatprep.subr.mxu0 0.0
  %81 = vmatpush2.msra.mxu0 0.0
  %82 = vmatprep.subr.mxu0 0.0
  %83 = vmatpush2.msra.mxu0 0.0
  %84 = vmatprep.subr.mxu0 0.0
  %85 = vmatpush2.msra.mxu0 0.0
  %86 = vmatprep.subr.mxu0 0.0
  %87 = vmatpush2.msra.mxu0 0.0
  %88 = vmatprep.subr.mxu0 0.0
  %89 = vmatpush2.msra.mxu0 0.0
  %90 = vmatprep.subr.mxu0 0.0
  %91 = vmatpush2.msra.mxu0 0.0
  %92 = vmatprep.subr.mxu0 0.0
  %93 = vmatpush2.msra.mxu0 0.0
  %94 = vmatprep.subr.mxu0 0.0
  %95 = vmatpush2.msra.mxu0 0.0
  %96 = vmatprep.subr.mxu0 0.0
  %97 = vmatpush2.msra.mxu0 0.0
  %98 = vmatprep.subr.mxu0 0.0
  %99 = vmatpush2.msra.mxu0 0.0
  %100 = vmatprep.subr.mxu0 0.0
  %101 = vmatpush2.msra.mxu0 0.0
  %102 = vmatprep.mubr.f32.mxu0 0.0
  %103 = vmatmul.mubr.f32.gmra.mxu0 %v33
  %v104 = vpop.f32.mrf.mxu0
  %v105 = vadd.f32 0.0, %v104
  %v106 = vpop.f32.mrf.mxu0
  %107 = vmatprep.mubr.f32.mxu0 0.0
  %108 = vmatmul.mubr.f32.gmra.mxu0 %v36
  %v109 = vpop.f32.mrf.mxu0
  %v110 = vadd.f32 0.0, %v109
  %v111 = vpop.f32.mrf.mxu0
  %112 = vdwg.mxu0
  %v113 = vmul.f32 %v105, %v105
  %v114 = vmul.f32 %v110, %v110
  %117 = vrot.lane.b32.xlu0 %v113, 64
  %v118 = vpop.permute.xlu0 %117
  %119 = vrot.lane.b32.xlu0 %v114, 64
  %v120 = vpop.permute.xlu0 %119
  %v123 = vsub.f32 %v105, %v118
  %v124 = vsub.f32 %v110, %v120
  %v125 = vadd.f32 %v123, 1e-05
  %v126 = vadd.f32 %v124, 1e-05
  %v127 = vadd.f32 %v125, 1.0
  %v128 = vadd.f32 %v126, 1.0
  %v129 = vrsqrt.pop %v127
  %v130 = vrsqrt.pop %v128
  %v131 = vsub.f32 %v16, %v105
  %v132 = vsub.f32 %v17, %v110
  %135 = vrot.lane.b32.xlu0 %v129, 64
  %v136 = vpop.permute.xlu0 %135
  %137 = vrot.lane.b32.xlu0 %v130, 64
  %v138 = vpop.permute.xlu0 %137
  %v141 = vmul.f32 %v131, %v136
  %v142 = vmul.f32 %v132, %v138
  %143 = vst.msk [vmem:[%s2] sm:$0xff] %vm28, %v141
  %144 = vst.msk [vmem:[%s2 + $0x8] sm:$0xff] %vm28, %v142
  %145 = vst.msk [vmem:[%s3] sm:$0xff] %vm28, %v105
  %146 = vst.msk [vmem:[%s3 + $0x8] sm:$0xff] %vm28, %v110
  %v147 = vrsqrt.pop %v125
  %v148 = vmul.f32 %v125, %v147
  %vm149 = vcmp.eq.f32.partialorder %v125, inf
  %v150 = vsel %vm149, %v125, %v148
  %vm151 = vcmp.eq.f32.partialorder %v125, 0.0
  %v152 = vand.u32 %v125, 2147483648
  %v153 = vsel %vm151, %v152, %v150
  %v154 = vrsqrt.pop %v126
  %v155 = vmul.f32 %v126, %v154
  %vm156 = vcmp.eq.f32.partialorder %v126, inf
  %v157 = vsel %vm156, %v126, %v155
  %vm158 = vcmp.eq.f32.partialorder %v126, 0.0
  %v159 = vand.u32 %v126, 2147483648
  %v160 = vsel %vm158, %v159, %v157
  %163 = vrot.lane.b32.xlu0 %v153, 64
  %v164 = vpop.permute.xlu0 %163
  %165 = vrot.lane.b32.xlu0 %v160, 64
  %v166 = vpop.permute.xlu0 %165
  %169 = vst.msk [vmem:[%s4] sm:$0xff] %vm28, %v164
  %170 = vst.msk [vmem:[%s4 + $0x8] sm:$0xff] %vm28, %v166
  // Predicated region
  $region10: #{ada_spatial_norm.3} parent=0 // pred_check
    _
  $region11: #{ada_spatial_norm.3} parent=0 // pred_check_branch
    %172 = sbr.rel (0) target = $region13
  $region12: #{ada_spatial_norm.3} parent=0 // pred_region
    _
  $region13: #{ada_spatial_norm.3} parent=0 // pred_fallthru
    _
  // Predicated region
  $region14: #{ada_spatial_norm.3} parent=0 // pred_check
    _
  $region15: #{ada_spatial_norm.3} parent=0 // pred_check_branch
    %174 = sbr.rel (0) target = $region17
  $region16: #{ada_spatial_norm.3} parent=0 // pred_region
    _
  $region17: #{ada_spatial_norm.3} parent=0 // pred_fallthru
    _
  // Predicated region
  $region18: #{ada_spatial_norm.3} parent=0 // pred_check
    _
  $region19: #{ada_spatial_norm.3} parent=0 // pred_check_branch
    %176 = sbr.rel (0) target = $region21
  $region20: #{ada_spatial_norm.3} parent=0 // pred_region
    _
  $region21: #{ada_spatial_norm.3} parent=0 // pred_fallthru
    _
  // Predicated region
  $region22: #{ada_spatial_norm.3} parent=0 // pred_check
    _
  $region23: #{ada_spatial_norm.3} parent=0 // pred_check_branch
    %178 = sbr.rel (0) target = $region25
  $region24: #{ada_spatial_norm.3} parent=0 // pred_region
    _
  $region25: #{ada_spatial_norm.3} parent=0 // pred_fallthru
    _
  // Predicated region
  $region26: #{ada_spatial_norm.3} parent=0 // pred_check
    _
  $region27: #{ada_spatial_norm.3} parent=0 // pred_check_branch
    %180 = sbr.rel (0) target = $region29
  $region28: #{ada_spatial_norm.3} parent=0 // pred_region
    _
  $region29: #{ada_spatial_norm.3} parent=0 // pred_fallthru
    _
  // Predicated region
  $region30: #{ada_spatial_norm.3} parent=0 // pred_check
    _
  $region31: #{ada_spatial_norm.3} parent=0 // pred_check_branch
    %182 = sbr.rel (0) target = $region33
  $region32: #{ada_spatial_norm.3} parent=0 // pred_region
    _
  $region33: #{ada_spatial_norm.3} parent=0 // pred_fallthru
    _

</llo_original>
